<compile_context>
chip_gen: v6e
topology: v6e:2x2x1
jax: 0.10.0
libtpu: 0.0.40
codegen_flags: <defaults>
</compile_context>

<pallas_src>
import jax
import jax.numpy as jnp
from jax.experimental import pallas as pl
from jax.experimental.pallas import tpu as pltpu

_LANES = 1024                   # wide lane-dense last dim (multiple of 128)
_TARGET_BLOCK_BYTES = 4 << 20   # ~4 MiB of f32 output per grid block
_MIN_PALLAS_ELEMS = 128 * 1024  # below this, fused XLA elementwise wins
_VMEM_LIMIT_BYTES = 48 << 20    # covers v5e default-scope gap, < v7x 64 MiB


# ----------------------------- kernels --------------------------------------

def _fire_kernel(thr_ref, mem_ref, spk_ref):
    # Single-output fast path (graded_spikes_factor == 1): spk == reset.
    x = mem_ref[...].astype(jnp.float32)
    spk_ref[...] = ((x - thr_ref[0]) > 0).astype(jnp.float32)


def _fire_reset_kernel(thr_ref, gsf_ref, mem_ref, spk_ref, reset_ref):
    x = mem_ref[...].astype(jnp.float32)
    heav = ((x - thr_ref[0]) > 0).astype(jnp.float32)
    reset_ref[...] = heav
    spk_ref[...] = heav * gsf_ref[0]


# ----------------------------- helpers --------------------------------------

def _num_elements(v):
    n = 1
    for d in jnp.shape(v):
        n *= d
    return n


def _choose_tile_rows(rows, lanes):
    """Rows per block: ~4 MiB f32 output, multiple of 8, >=2 blocks if possible."""
    t = (_TARGET_BLOCK_BYTES // (lanes * 4)) // 8 * 8
    t = max(8, t)
    if rows > t:
        return t
    if rows >= 16:
        # Force at least 2 grid steps so both v7x TensorCores get work.
        half = -(-rows // 2)
        return -(-half // 8) * 8
    return rows  # full-extent block (allowed even if not a multiple of 8)


def _jnp_fire(mem, thr_f32, gsf_f32):
    heav = ((mem.astype(jnp.float32) - thr_f32) > 0).astype(jnp.float32)
    return heav * gsf_f32, heav


def _pallas_fire_2d(mem2d, thr_smem, gsf_smem, gsf_is_one):
    """Run the elementwise fire/reset kernel on a lane-dense 2-D slab."""
    rows, lanes = mem2d.shape
    tile_r = _choose_tile_rows(rows, lanes)
    grid = (pl.cdiv(rows, tile_r),)
    blk = pl.BlockSpec((tile_r, lanes), lambda i: (i, 0))
    smem = pl.BlockSpec(memory_space=pltpu.MemorySpace.SMEM)
    params = pltpu.CompilerParams(
        dimension_semantics=("parallel",),
        vmem_limit_bytes=_VMEM_LIMIT_BYTES,
    )
    out_sd = jax.ShapeDtypeStruct((rows, lanes), jnp.float32)

    if gsf_is_one:
        spk = pl.pallas_call(
            _fire_kernel,
            out_shape=out_sd,
            grid=grid,
            in_specs=[smem, blk],
            out_specs=blk,
            compiler_params=params,
        )(thr_smem, mem2d)
        return spk, spk  # reset == spk when graded_spikes_factor == 1

    spk, reset = pl.pallas_call(
        _fire_reset_kernel,
        out_shape=(out_sd, out_sd),
        grid=grid,
        in_specs=[smem, smem, blk],
        out_specs=(blk, blk),
        compiler_params=params,
    )(thr_smem, gsf_smem, mem2d)
    return spk, reset


# ----------------------------- wrapper ---------------------------------------

def spiking_neuron_fire(mem, threshold=1.0, graded_spikes_factor=1.0):
    """Returns (spk, reset) matching snntorch's fire()/mem_reset() forward.

    mem: float array of any shape (NCHW typical).  Outputs are float32
    (matching snntorch's `.float()` semantics).  threshold and
    graded_spikes_factor may be Python scalars or (possibly traced) scalar
    arrays (learnable threshold support).
    """
    orig_shape = mem.shape
    total = mem.size

    thr_is_scalar = _num_elements(threshold) == 1
    gsf_is_scalar = _num_elements(graded_spikes_factor) == 1
    gsf_is_one = (not isinstance(graded_spikes_factor, jax.Array)
                  and gsf_is_scalar
                  and float(graded_spikes_factor) == 1.0)

    thr_f32 = jnp.asarray(threshold, jnp.float32)
    gsf_f32 = jnp.asarray(graded_spikes_factor, jnp.float32)

    # Tiny tensors / non-scalar params: a fused XLA elementwise op is strictly
    # faster than pallas_call + reshape plumbing.
    if total < _MIN_PALLAS_ELEMS or not (thr_is_scalar and gsf_is_scalar):
        return _jnp_fire(mem, thr_f32, gsf_f32)

    thr_smem = thr_f32.reshape(1)
    gsf_smem = gsf_f32.reshape(1)
    last = orig_shape[-1] if len(orig_shape) >= 1 else 1

    if total % _LANES == 0:
        # Perfectly lane-aligned: free reshape to a wide slab, no copies.
        mem2d = mem.reshape(total // _LANES, _LANES)
        spk2d, rst2d = _pallas_fire_2d(mem2d, thr_smem, gsf_smem, gsf_is_one)
        return spk2d.reshape(orig_shape), rst2d.reshape(orig_shape)

    if len(orig_shape) >= 2 and last % 128 == 0 and last <= 65536:
        # Last dim already lane-aligned: collapse leading dims, no copies.
        rows = total // last
        mem2d = mem.reshape(rows, last)
        spk2d, rst2d = _pallas_fire_2d(mem2d, thr_smem, gsf_smem, gsf_is_one)
        return spk2d.reshape(orig_shape), rst2d.reshape(orig_shape)

    # Ragged: run the (multiple-of-1024) bulk through Pallas and the <1024-elem
    # tail through plain jnp, then stitch — no full-array pad/slice round-trip.
    flat = mem.reshape(-1)
    main_len = (total // _LANES) * _LANES
    main2d = flat[:main_len].reshape(main_len // _LANES, _LANES)
    spk_m, rst_m = _pallas_fire_2d(main2d, thr_smem, gsf_smem, gsf_is_one)
    tail = flat[main_len:]
    spk_t, rst_t = _jnp_fire(tail, thr_f32, gsf_f32)
    spk = jnp.concatenate([spk_m.reshape(-1), spk_t]).reshape(orig_shape)
    reset = jnp.concatenate([rst_m.reshape(-1), rst_t]).reshape(orig_shape)
    return spk, reset


# ----------------------------- test ------------------------------------------

if __name__ == "__main__":
    key = jax.random.PRNGKey(0)
    k1, k2, k3, k4 = jax.random.split(key, 4)

    def ref_fire(mem, thr, gsf):
        heav = ((mem.astype(jnp.float32) - jnp.float32(thr)) > 0).astype(jnp.float32)
        return heav * jnp.float32(gsf), heav

    # Case 1: tiny NCHW tensor -> fused-XLA bail-out path (below Pallas cutoff).
    x1 = jax.random.normal(k1, (2, 4, 16, 16), dtype=jnp.float32) * 2.0
    spk1, rst1 = spiking_neuron_fire(x1, threshold=1.0, graded_spikes_factor=1.0)
    spk1, rst1 = jax.block_until_ready(spk1), jax.block_until_ready(rst1)
    r_spk1, r_rst1 = ref_fire(x1, 1.0, 1.0)
    assert spk1.shape == x1.shape and spk1.dtype == jnp.float32
    assert jnp.array_equal(spk1, r_spk1) and jnp.array_equal(rst1, r_rst1)

    # Case 2: lane-aligned (total % 1024 == 0), gsf == 1 single-output Pallas
    # path, threshold given as a (traced-style) jnp scalar.
    x2 = jax.random.normal(k2, (2, 8, 128, 128), dtype=jnp.float32) * 2.0
    thr2 = jnp.float32(0.75)
    spk2, rst2 = spiking_neuron_fire(x2, threshold=thr2, graded_spikes_factor=1.0)
    spk2, rst2 = jax.block_until_ready(spk2), jax.block_until_ready(rst2)
    r_spk2, r_rst2 = ref_fire(x2, 0.75, 1.0)
    assert spk2.shape == x2.shape and spk2.dtype == jnp.float32
    assert jnp.array_equal(spk2, r_spk2) and jnp.array_equal(rst2, r_rst2)

    # Case 3: last-dim-aligned (128 lanes), bf16 input, gsf != 1 two-output
    # Pallas path (exercises the in-kernel f32 upcast).
    x3 = (jax.random.normal(k3, (1, 1333, 128), dtype=jnp.float32) * 2.0
          ).astype(jnp.bfloat16)
    spk3, rst3 = spiking_neuron_fire(x3, threshold=1.0, graded_spikes_factor=2.0)
    spk3, rst3 = jax.block_until_ready(spk3), jax.block_until_ready(rst3)
    r_spk3, r_rst3 = ref_fire(x3, 1.0, 2.0)
    assert spk3.shape == x3.shape and spk3.dtype == jnp.float32
    assert jnp.array_equal(spk3, r_spk3) and jnp.array_equal(rst3, r_rst3)

    # Case 4: ragged shape (neither total nor last dim aligned), gsf != 1
    # (exercises the bulk-Pallas + jnp-tail stitch path).
    x4 = jax.random.normal(k4, (3, 5, 97, 130), dtype=jnp.float32) * 2.0
    spk4, rst4 = spiking_neuron_fire(x4, threshold=1.0, graded_spikes_factor=0.5)
    spk4, rst4 = jax.block_until_ready(spk4), jax.block_until_ready(rst4)
    r_spk4, r_rst4 = ref_fire(x4, 1.0, 0.5)
    assert spk4.shape == x4.shape and spk4.dtype == jnp.float32
    assert jnp.array_equal(spk4, r_spk4) and jnp.array_equal(rst4, r_rst4)

    print("KERNEL_OK")
</pallas_src>

<mosaic_0001>
module attributes {stable_mosaic.version = 11 : i64} {
  func.func @_fire_kernel(%arg0: i32, %arg1: memref<1xf32, #tpu.memory_space<smem>>, %arg2: memref<128x1024xf32, #tpu.memory_space<vmem>>, %arg3: memref<128x1024xf32, #tpu.memory_space<vmem>>) attributes {dimension_semantics = [#tpu.dimension_semantics<parallel>], iteration_bounds = array<i64: 2>, scalar_prefetch = 0 : i64, scratch_operands = 0 : i64, tpu.core_type = #tpu.core_type<tc>, window_params = [{transform_indices = @transform_0, window_bounds = array<i64: 1>}, {transform_indices = @transform_1, window_bounds = array<i64: 128, 1024>}, {transform_indices = @transform_2, window_bounds = array<i64: 128, 1024>}]} {
    %c0 = arith.constant 0 : index
    %c0_0 = arith.constant 0 : index
    %0 = vector.load %arg2[%c0, %c0_0] : memref<128x1024xf32, #tpu.memory_space<vmem>>, vector<128x1024xf32>
    %c0_1 = arith.constant 0 : index
    %1 = memref.load %arg1[%c0_1] : memref<1xf32, #tpu.memory_space<smem>>
    %2 = vector.broadcast %1 : f32 to vector<128x1024xf32>
    %3 = arith.subf %0, %2 : vector<128x1024xf32>
    %cst = arith.constant 0.000000e+00 : f32
    %4 = vector.broadcast %cst : f32 to vector<128x1024xf32>
    %5 = arith.cmpf ogt, %3, %4 : vector<128x1024xf32>
    %6 = arith.extui %5 : vector<128x1024xi1> to vector<128x1024xi32>
    %7 = arith.sitofp %6 : vector<128x1024xi32> to vector<128x1024xf32>
    %c0_2 = arith.constant 0 : index
    %c0_3 = arith.constant 0 : index
    %8 = vector.load %arg3[%c0_2, %c0_3] : memref<128x1024xf32, #tpu.memory_space<vmem>>, vector<128x1024xf32>
    tpu.vector_store %arg3[%c0_2, %c0_3], %7 {strides = array<i32>} : memref<128x1024xf32, #tpu.memory_space<vmem>>, vector<128x1024xf32>,
    return
  }
  func.func @transform_0(%arg0: i32) -> i32 {
    %c0_i32 = arith.constant 0 : i32
    %c0_i32_0 = arith.constant 0 : i32
    return %c0_i32 : i32
  }
  func.func @transform_1(%arg0: i32) -> (i32, i32) {
    %c0_i32 = arith.constant 0 : i32
    %c0_i32_0 = arith.constant 0 : i32
    return %arg0, %c0_i32 : i32, i32
  }
  func.func @transform_2(%arg0: i32) -> (i32, i32) {
    %c0_i32 = arith.constant 0 : i32
    %c0_i32_0 = arith.constant 0 : i32
    return %arg0, %c0_i32 : i32, i32
  }
}

</mosaic_0001>

<llo_original>
// kernel: tpu_custom_call.1
$region0: #{tpu_custom_call.1}
  #allocation0 [shape = 'u32[]', space=smem, size = 0x4, offset = 0x4, fixed_abs, tag = 'smem constant byte address 0x4 - core index']
  #allocation1 [shape = 'u32[144,128]{1,0:T(1,128)}', space=vmem, size = 0x12000, scoped, tag = 'internal scratch']
  #allocation2 [shape = 'f32[1]{0:T(128)S(6)}', space=smem, size = 0x200, scoped, tag = 'scoped memory for tpu_custom_call.1']
  %s0 = inlined_call_operand.<no memory space> [shape: f32[1], index: 0, kind: input, shape index: {}]
  %s1 = inlined_call_operand.hbm [shape: f32[256,1024], index: 1, kind: input, shape index: {}]
  %s2 = inlined_call_operand.hbm [shape: f32[256,1024], index: 2, kind: output, shape index: {}]
  %s3 = sld [smem:[#allocation0]]
  $region45: #{tpu_custom_call.1} parent=0
    _
  %s5 = ssub.s32 1, %s3
  %s6 = scalar_select 0, %s5, %s3
  %7 = sst [smem:[#allocation2]] %s0
  $region1: #{tpu_custom_call.1} parent=0
    #allocation3 [shape = 'u8[1048576]{0}', space=vmem, size = 0x100000, scoped, tag = 'input window, operand 1']
    #allocation4 [shape = 's32[2]{0}', space=sflag, size = 0x8, scoped, tag = 'scoped memory for tpu_custom_call.1']
    #allocation5 [shape = 's32[2]{0}', space=sflag, size = 0x8, scoped, tag = 'scoped memory for tpu_custom_call.1']
    #allocation6 [shape = 'u8[1048576]{0}', space=vmem, size = 0x100000, scoped, tag = 'output window, operand 0']
    %8 = vsyncpa [#allocation4], 0
    %s9 = scalar_lea.sflag [#allocation4], 1
    %10 = vsyncpa %s9, 0
    %11 = vsyncpa [#allocation5], 0
    %s12 = scalar_lea.sflag [#allocation5], 1
    %13 = vsyncpa %s12, 0
    loop: start=0, step=1, limit=4
    $region2: #{tpu_custom_call.1} parent=1 // loop_pre_header
      _
    $region3: #{tpu_custom_call.1} parent=1 // loop_header
      %s15 = sphi 0, %s19
      %p16 = scmp.ge.s32.totalorder %s15, 4
      %s23 = sphi 0, %s23
      %s25 = sphi 0, %s23
      %s26 = sphi 0, %s25
      %s40 = sphi 0, %s26
      %s46 = sphi 0, %s48
      %s49 = sphi 0, %s46
      %s50 = sphi 0, %s49
      %s66 = sphi 0, %s50
      %s72 = sphi 0, %s74
      %s75 = sphi 0, %s72
      %s76 = sphi 0, %s75
      %s92 = sphi 0, %s76
    $region4: #{tpu_custom_call.1} parent=1 // loop_header_branch
      %18 = sbr.rel (%p16) target = $region8
    $region5: #{tpu_custom_call.1} parent=1 // loop_body
      %s20 = ssub.s32 %s15, 1
      %s21 = ssub.s32 %s15, 2
      %s22 = sadd.s32 %s15, 1
      %s24 = sadd.s32 %s23, 1
      %p27 = scmp.eq.s32.totalorder %s15, 1
      %p28 = scmp.ne.s32.totalorder %s23, %s25
      %p29 = scmp.eq.s32.totalorder %s15, 0
      %p30 = por %p28, %p29
      %p31 = scmp.ne.s32.totalorder %s23, %s25
      %p32 = scmp.eq.s32.totalorder %s20, 1
      %p33 = por %p31, %p32
      %p34 = scmp.ne.s32.totalorder %s25, %s26
      %p35 = scmp.eq.s32.totalorder %s20, 0
      %p36 = por %p34, %p35
      %p37 = scmp.ne.s32.totalorder %s25, %s26
      %p38 = scmp.eq.s32.totalorder %s21, 1
      %p39 = por %p37, %p38
      %p41 = scmp.ne.s32.totalorder %s26, %s40
      %p42 = scmp.eq.s32.totalorder %s21, 0
      %p43 = por %p41, %p42
      %s44 = ssub.s32 %s15, %s22
      %p45 = scmp.eq.s32.totalorder %s44, 0
      %s47 = sadd.s32 %s46, 1
      %s48 = scalar_select %p45, %s46, %s47
      %p51 = pneg %p45
      %p52 = scmp.eq.s32.totalorder %s15, 1
      %p53 = por %p51, %p52
      %p54 = scmp.ne.s32.totalorder %s46, %s49
      %p55 = scmp.eq.s32.totalorder %s15, 0
      %p56 = por %p54, %p55
      %p57 = scmp.ne.s32.totalorder %s46, %s49
      %p58 = scmp.eq.s32.totalorder %s20, 1
      %p59 = por %p57, %p58
      %p60 = scmp.ne.s32.totalorder %s49, %s50
      %p61 = scmp.eq.s32.totalorder %s20, 0
      %p62 = por %p60, %p61
      %p63 = scmp.ne.s32.totalorder %s49, %s50
      %p64 = scmp.eq.s32.totalorder %s21, 1
      %p65 = por %p63, %p64
      %p67 = scmp.ne.s32.totalorder %s50, %s66
      %p68 = scmp.eq.s32.totalorder %s21, 0
      %p69 = por %p67, %p68
      %s70 = ssub.s32 %s15, %s22
      %p71 = scmp.eq.s32.totalorder %s70, 0
      %s73 = sadd.s32 %s72, 1
      %s74 = scalar_select %p71, %s72, %s73
      %p77 = pneg %p71
      %p78 = scmp.eq.s32.totalorder %s15, 1
      %p79 = por %p77, %p78
      %p80 = scmp.ne.s32.totalorder %s72, %s75
      %p81 = scmp.eq.s32.totalorder %s15, 0
      %p82 = por %p80, %p81
      %p83 = scmp.ne.s32.totalorder %s72, %s75
      %p84 = scmp.eq.s32.totalorder %s20, 1
      %p85 = por %p83, %p84
      %p86 = scmp.ne.s32.totalorder %s75, %s76
      %p87 = scmp.eq.s32.totalorder %s20, 0
      %p88 = por %p86, %p87
      %p89 = scmp.ne.s32.totalorder %s75, %s76
      %p90 = scmp.eq.s32.totalorder %s21, 1
      %p91 = por %p89, %p90
      %p93 = scmp.ne.s32.totalorder %s76, %s92
      %p94 = scmp.eq.s32.totalorder %s21, 0
      %p95 = por %p93, %p94
      %p96 = scmp.le.s32.totalorder 1, %s15
      %p97 = scmp.lt.s32.totalorder %s15, 3
      %p98 = pnand %p96, %p97
      %p99 = pneg %p98
      // Predicated region
      $region9: #{tpu_custom_call.1} parent=5 // pred_check
        _
      $region10: #{tpu_custom_call.1} parent=5 // pred_check_branch
        %101 = sbr.rel (%p98) target = $region12
      $region11: #{tpu_custom_call.1} parent=5 // pred_region
        %s102 = ssub.s32 %s15, 1
        // Predicated region
        $region13: #{tpu_custom_call.1} parent=11 // pred_check
          %p103 = pneg %p36
        $region14: #{tpu_custom_call.1} parent=11 // pred_check_branch
          %105 = sbr.rel (%p103) target = $region16
        $region15: #{tpu_custom_call.1} parent=11 // pred_region
          _
        $region16: #{tpu_custom_call.1} parent=11 // pred_fallthru
          _
      $region12: #{tpu_custom_call.1} parent=5 // pred_fallthru
        _
      %p106 = scmp.lt.s32.totalorder %s15, 2
      // Predicated region
      $region17: #{tpu_custom_call.1} parent=5 // pred_check
        %p107 = pneg %p106
      $region18: #{tpu_custom_call.1} parent=5 // pred_check_branch
        %109 = sbr.rel (%p107) target = $region20
      $region19: #{tpu_custom_call.1} parent=5 // pred_region
        // Predicated region
        $region21: #{tpu_custom_call.1} parent=19 // pred_check
          %p110 = pneg %p56
        $region22: #{tpu_custom_call.1} parent=19 // pred_check_branch
          %112 = sbr.rel (%p110) target = $region24
        $region23: #{tpu_custom_call.1} parent=19 // pred_region
          %s113 = sand.u32 %s46, 1
          %s114 = scalar_lea.sflag [#allocation4], %s113
          %s115 = sand.u32 %s46, 1
          %s116 = smul.addr %s115, 1024
          %s117 = scalar_lea.vmem [#allocation3], %s116
          %s118 = smul.u32 16, %s15
          %s120 = ssub.s32 16384, 16384
          %121 = vsyncadd %s114, %s120
          %s122 = smul.addr %s118, 8
          %s123 = smul.addr %s122, 128
          %s124 = scalar_lea.hbm %s1, %s123
          %s125 = sshll.u32 %s117, 4
          %s126 = int_to_ptr.vmem [resolvable:$true] %s125
          %131 = dma.hbm_to_vmem [thread:$0]  %s124, 16384, %s126, %s114, 1024, 1024, 64
        $region24: #{tpu_custom_call.1} parent=19 // pred_fallthru
          _
      $region20: #{tpu_custom_call.1} parent=5 // pred_fallthru
        _
      %p132 = scmp.le.s32.totalorder 1, %s15
      %p133 = scmp.lt.s32.totalorder %s15, 3
      %p134 = pnand %p132, %p133
      %p135 = pneg %p134
      // Predicated region
      $region25: #{tpu_custom_call.1} parent=5 // pred_check
        _
      $region26: #{tpu_custom_call.1} parent=5 // pred_check_branch
        %137 = sbr.rel (%p134) target = $region28
      $region27: #{tpu_custom_call.1} parent=5 // pred_region
        %s138 = ssub.s32 %s15, 1
        %s139 = sand.u32 %s49, 1
        %s140 = scalar_lea.sflag [#allocation4], %s139
        %s141 = sand.u32 %s49, 1
        %s142 = smul.addr %s141, 1024
        %s143 = scalar_lea.vmem [#allocation3], %s142
        // Predicated region
        $region29: #{tpu_custom_call.1} parent=27 // pred_check
          %p144 = pneg %p62
        $region30: #{tpu_custom_call.1} parent=27 // pred_check_branch
          %146 = sbr.rel (%p144) target = $region32
        $region31: #{tpu_custom_call.1} parent=27 // pred_region
          %147 = dma.done %s140, 16384
        $region32: #{tpu_custom_call.1} parent=27 // pred_fallthru
          _
        %p148 = pneg %p36
        %p149 = pneg %p33
        %s150 = sand.u32 %s49, 1
        %s151 = scalar_lea.sflag [#allocation4], %s150
        %s152 = sand.u32 %s49, 1
        %s153 = smul.addr %s152, 1024
        %s154 = scalar_lea.vmem [#allocation3], %s153
        %p155 = pneg %p62
        %p156 = pneg %p59
        %p157 = pneg %p88
        %p158 = pneg %p85
        %s159 = sand.u32 %s75, 1
        %s160 = scalar_lea.sflag [#allocation5], %s159
        %s161 = sand.u32 %s75, 1
        %s162 = smul.addr %s161, 1024
        %s163 = scalar_lea.vmem [#allocation6], %s162
        %s164 = smul.u32 16, %s20
        %s165 = smul.u32 16, %s20
        %v166 = vld [vmem:[%s143] sm:$0xff]
        %v167 = vld [vmem:[%s143 + $0x8] sm:$0xff]
        %v168 = vld [vmem:[%s143 + $0x10] sm:$0xff]
        %v169 = vld [vmem:[%s143 + $0x18] sm:$0xff]
        %v170 = vld [vmem:[%s143 + $0x20] sm:$0xff]
        %v171 = vld [vmem:[%s143 + $0x28] sm:$0xff]
        %v172 = vld [vmem:[%s143 + $0x30] sm:$0xff]
        %v173 = vld [vmem:[%s143 + $0x38] sm:$0xff]
        %v174 = vld [vmem:[%s143 + $0x40] sm:$0xff]
        %v175 = vld [vmem:[%s143 + $0x48] sm:$0xff]
        %v176 = vld [vmem:[%s143 + $0x50] sm:$0xff]
        %v177 = vld [vmem:[%s143 + $0x58] sm:$0xff]
        %v178 = vld [vmem:[%s143 + $0x60] sm:$0xff]
        %v179 = vld [vmem:[%s143 + $0x68] sm:$0xff]
        %v180 = vld [vmem:[%s143 + $0x70] sm:$0xff]
        %v181 = vld [vmem:[%s143 + $0x78] sm:$0xff]
        %v182 = vld [vmem:[%s143 + $0x80] sm:$0xff]
        %v183 = vld [vmem:[%s143 + $0x88] sm:$0xff]
        %v184 = vld [vmem:[%s143 + $0x90] sm:$0xff]
        %v185 = vld [vmem:[%s143 + $0x98] sm:$0xff]
        %v186 = vld [vmem:[%s143 + $0xa0] sm:$0xff]
        %v187 = vld [vmem:[%s143 + $0xa8] sm:$0xff]
        %v188 = vld [vmem:[%s143 + $0xb0] sm:$0xff]
        %v189 = vld [vmem:[%s143 + $0xb8] sm:$0xff]
        %v190 = vld [vmem:[%s143 + $0xc0] sm:$0xff]
        %v191 = vld [vmem:[%s143 + $0xc8] sm:$0xff]
        %v192 = vld [vmem:[%s143 + $0xd0] sm:$0xff]
        %v193 = vld [vmem:[%s143 + $0xd8] sm:$0xff]
        %v194 = vld [vmem:[%s143 + $0xe0] sm:$0xff]
        %v195 = vld [vmem:[%s143 + $0xe8] sm:$0xff]
        %v196 = vld [vmem:[%s143 + $0xf0] sm:$0xff]
        %v197 = vld [vmem:[%s143 + $0xf8] sm:$0xff]
        %v198 = vld [vmem:[%s143 + $0x100] sm:$0xff]
        %v199 = vld [vmem:[%s143 + $0x108] sm:$0xff]
        %v200 = vld [vmem:[%s143 + $0x110] sm:$0xff]
        %v201 = vld [vmem:[%s143 + $0x118] sm:$0xff]
        %v202 = vld [vmem:[%s143 + $0x120] sm:$0xff]
        %v203 = vld [vmem:[%s143 + $0x128] sm:$0xff]
        %v204 = vld [vmem:[%s143 + $0x130] sm:$0xff]
        %v205 = vld [vmem:[%s143 + $0x138] sm:$0xff]
        %v206 = vld [vmem:[%s143 + $0x140] sm:$0xff]
        %v207 = vld [vmem:[%s143 + $0x148] sm:$0xff]
        %v208 = vld [vmem:[%s143 + $0x150] sm:$0xff]
        %v209 = vld [vmem:[%s143 + $0x158] sm:$0xff]
        %v210 = vld [vmem:[%s143 + $0x160] sm:$0xff]
        %v211 = vld [vmem:[%s143 + $0x168] sm:$0xff]
        %v212 = vld [vmem:[%s143 + $0x170] sm:$0xff]
        %v213 = vld [vmem:[%s143 + $0x178] sm:$0xff]
        %v214 = vld [vmem:[%s143 + $0x180] sm:$0xff]
        %v215 = vld [vmem:[%s143 + $0x188] sm:$0xff]
        %v216 = vld [vmem:[%s143 + $0x190] sm:$0xff]
        %v217 = vld [vmem:[%s143 + $0x198] sm:$0xff]
        %v218 = vld [vmem:[%s143 + $0x1a0] sm:$0xff]
        %v219 = vld [vmem:[%s143 + $0x1a8] sm:$0xff]
        %v220 = vld [vmem:[%s143 + $0x1b0] sm:$0xff]
        %v221 = vld [vmem:[%s143 + $0x1b8] sm:$0xff]
        %v222 = vld [vmem:[%s143 + $0x1c0] sm:$0xff]
        %v223 = vld [vmem:[%s143 + $0x1c8] sm:$0xff]
        %v224 = vld [vmem:[%s143 + $0x1d0] sm:$0xff]
        %v225 = vld [vmem:[%s143 + $0x1d8] sm:$0xff]
        %v226 = vld [vmem:[%s143 + $0x1e0] sm:$0xff]
        %v227 = vld [vmem:[%s143 + $0x1e8] sm:$0xff]
        %v228 = vld [vmem:[%s143 + $0x1f0] sm:$0xff]
        %v229 = vld [vmem:[%s143 + $0x1f8] sm:$0xff]
        %v230 = vld [vmem:[%s143 + $0x200] sm:$0xff]
        %v231 = vld [vmem:[%s143 + $0x208] sm:$0xff]
        %v232 = vld [vmem:[%s143 + $0x210] sm:$0xff]
        %v233 = vld [vmem:[%s143 + $0x218] sm:$0xff]
        %v234 = vld [vmem:[%s143 + $0x220] sm:$0xff]
        %v235 = vld [vmem:[%s143 + $0x228] sm:$0xff]
        %v236 = vld [vmem:[%s143 + $0x230] sm:$0xff]
        %v237 = vld [vmem:[%s143 + $0x238] sm:$0xff]
        %v238 = vld [vmem:[%s143 + $0x240] sm:$0xff]
        %v239 = vld [vmem:[%s143 + $0x248] sm:$0xff]
        %v240 = vld [vmem:[%s143 + $0x250] sm:$0xff]
        %v241 = vld [vmem:[%s143 + $0x258] sm:$0xff]
        %v242 = vld [vmem:[%s143 + $0x260] sm:$0xff]
        %v243 = vld [vmem:[%s143 + $0x268] sm:$0xff]
        %v244 = vld [vmem:[%s143 + $0x270] sm:$0xff]
        %v245 = vld [vmem:[%s143 + $0x278] sm:$0xff]
        %v246 = vld [vmem:[%s143 + $0x280] sm:$0xff]
        %v247 = vld [vmem:[%s143 + $0x288] sm:$0xff]
        %v248 = vld [vmem:[%s143 + $0x290] sm:$0xff]
        %v249 = vld [vmem:[%s143 + $0x298] sm:$0xff]
        %v250 = vld [vmem:[%s143 + $0x2a0] sm:$0xff]
        %v251 = vld [vmem:[%s143 + $0x2a8] sm:$0xff]
        %v252 = vld [vmem:[%s143 + $0x2b0] sm:$0xff]
        %v253 = vld [vmem:[%s143 + $0x2b8] sm:$0xff]
        %v254 = vld [vmem:[%s143 + $0x2c0] sm:$0xff]
        %v255 = vld [vmem:[%s143 + $0x2c8] sm:$0xff]
        %v256 = vld [vmem:[%s143 + $0x2d0] sm:$0xff]
        %v257 = vld [vmem:[%s143 + $0x2d8] sm:$0xff]
        %v258 = vld [vmem:[%s143 + $0x2e0] sm:$0xff]
        %v259 = vld [vmem:[%s143 + $0x2e8] sm:$0xff]
        %v260 = vld [vmem:[%s143 + $0x2f0] sm:$0xff]
        %v261 = vld [vmem:[%s143 + $0x2f8] sm:$0xff]
        %v262 = vld [vmem:[%s143 + $0x300] sm:$0xff]
        %v263 = vld [vmem:[%s143 + $0x308] sm:$0xff]
        %v264 = vld [vmem:[%s143 + $0x310] sm:$0xff]
        %v265 = vld [vmem:[%s143 + $0x318] sm:$0xff]
        %v266 = vld [vmem:[%s143 + $0x320] sm:$0xff]
        %v267 = vld [vmem:[%s143 + $0x328] sm:$0xff]
        %v268 = vld [vmem:[%s143 + $0x330] sm:$0xff]
        %v269 = vld [vmem:[%s143 + $0x338] sm:$0xff]
        %v270 = vld [vmem:[%s143 + $0x340] sm:$0xff]
        %v271 = vld [vmem:[%s143 + $0x348] sm:$0xff]
        %v272 = vld [vmem:[%s143 + $0x350] sm:$0xff]
        %v273 = vld [vmem:[%s143 + $0x358] sm:$0xff]
        %v274 = vld [vmem:[%s143 + $0x360] sm:$0xff]
        %v275 = vld [vmem:[%s143 + $0x368] sm:$0xff]
        %v276 = vld [vmem:[%s143 + $0x370] sm:$0xff]
        %v277 = vld [vmem:[%s143 + $0x378] sm:$0xff]
        %v278 = vld [vmem:[%s143 + $0x380] sm:$0xff]
        %v279 = vld [vmem:[%s143 + $0x388] sm:$0xff]
        %v280 = vld [vmem:[%s143 + $0x390] sm:$0xff]
        %v281 = vld [vmem:[%s143 + $0x398] sm:$0xff]
        %v282 = vld [vmem:[%s143 + $0x3a0] sm:$0xff]
        %v283 = vld [vmem:[%s143 + $0x3a8] sm:$0xff]
        %v284 = vld [vmem:[%s143 + $0x3b0] sm:$0xff]
        %v285 = vld [vmem:[%s143 + $0x3b8] sm:$0xff]
        %v286 = vld [vmem:[%s143 + $0x3c0] sm:$0xff]
        %v287 = vld [vmem:[%s143 + $0x3c8] sm:$0xff]
        %v288 = vld [vmem:[%s143 + $0x3d0] sm:$0xff]
        %v289 = vld [vmem:[%s143 + $0x3d8] sm:$0xff]
        %v290 = vld [vmem:[%s143 + $0x3e0] sm:$0xff]
        %v291 = vld [vmem:[%s143 + $0x3e8] sm:$0xff]
        %v292 = vld [vmem:[%s143 + $0x3f0] sm:$0xff]
        %v293 = vld [vmem:[%s143 + $0x3f8] sm:$0xff]
        %s294 = sld [smem:[#allocation2]]
        %v295 = vstv %s294
        %v296 = vsub.f32 %v166, %v295
        %v297 = vsub.f32 %v167, %v295
        %v298 = vsub.f32 %v168, %v295
        %v299 = vsub.f32 %v169, %v295
        %v300 = vsub.f32 %v170, %v295
        %v301 = vsub.f32 %v171, %v295
        %v302 = vsub.f32 %v172, %v295
        %v303 = vsub.f32 %v173, %v295
        %v304 = vsub.f32 %v174, %v295
        %v305 = vsub.f32 %v175, %v295
        %v306 = vsub.f32 %v176, %v295
        %v307 = vsub.f32 %v177, %v295
        %v308 = vsub.f32 %v178, %v295
        %v309 = vsub.f32 %v179, %v295
        %v310 = vsub.f32 %v180, %v295
        %v311 = vsub.f32 %v181, %v295
        %v312 = vsub.f32 %v182, %v295
        %v313 = vsub.f32 %v183, %v295
        %v314 = vsub.f32 %v184, %v295
        %v315 = vsub.f32 %v185, %v295
        %v316 = vsub.f32 %v186, %v295
        %v317 = vsub.f32 %v187, %v295
        %v318 = vsub.f32 %v188, %v295
        %v319 = vsub.f32 %v189, %v295
        %v320 = vsub.f32 %v190, %v295
        %v321 = vsub.f32 %v191, %v295
        %v322 = vsub.f32 %v192, %v295
        %v323 = vsub.f32 %v193, %v295
        %v324 = vsub.f32 %v194, %v295
        %v325 = vsub.f32 %v195, %v295
        %v326 = vsub.f32 %v196, %v295
        %v327 = vsub.f32 %v197, %v295
        %v328 = vsub.f32 %v198, %v295
        %v329 = vsub.f32 %v199, %v295
        %v330 = vsub.f32 %v200, %v295
        %v331 = vsub.f32 %v201, %v295
        %v332 = vsub.f32 %v202, %v295
        %v333 = vsub.f32 %v203, %v295
        %v334 = vsub.f32 %v204, %v295
        %v335 = vsub.f32 %v205, %v295
        %v336 = vsub.f32 %v206, %v295
        %v337 = vsub.f32 %v207, %v295
        %v338 = vsub.f32 %v208, %v295
        %v339 = vsub.f32 %v209, %v295
        %v340 = vsub.f32 %v210, %v295
        %v341 = vsub.f32 %v211, %v295
        %v342 = vsub.f32 %v212, %v295
        %v343 = vsub.f32 %v213, %v295
        %v344 = vsub.f32 %v214, %v295
        %v345 = vsub.f32 %v215, %v295
        %v346 = vsub.f32 %v216, %v295
        %v347 = vsub.f32 %v217, %v295
        %v348 = vsub.f32 %v218, %v295
        %v349 = vsub.f32 %v219, %v295
        %v350 = vsub.f32 %v220, %v295
        %v351 = vsub.f32 %v221, %v295
        %v352 = vsub.f32 %v222, %v295
        %v353 = vsub.f32 %v223, %v295
        %v354 = vsub.f32 %v224, %v295
        %v355 = vsub.f32 %v225, %v295
        %v356 = vsub.f32 %v226, %v295
        %v357 = vsub.f32 %v227, %v295
        %v358 = vsub.f32 %v228, %v295
        %v359 = vsub.f32 %v229, %v295
        %v360 = vsub.f32 %v230, %v295
        %v361 = vsub.f32 %v231, %v295
        %v362 = vsub.f32 %v232, %v295
        %v363 = vsub.f32 %v233, %v295
        %v364 = vsub.f32 %v234, %v295
        %v365 = vsub.f32 %v235, %v295
        %v366 = vsub.f32 %v236, %v295
        %v367 = vsub.f32 %v237, %v295
        %v368 = vsub.f32 %v238, %v295
        %v369 = vsub.f32 %v239, %v295
        %v370 = vsub.f32 %v240, %v295
        %v371 = vsub.f32 %v241, %v295
        %v372 = vsub.f32 %v242, %v295
        %v373 = vsub.f32 %v243, %v295
        %v374 = vsub.f32 %v244, %v295
        %v375 = vsub.f32 %v245, %v295
        %v376 = vsub.f32 %v246, %v295
        %v377 = vsub.f32 %v247, %v295
        %v378 = vsub.f32 %v248, %v295
        %v379 = vsub.f32 %v249, %v295
        %v380 = vsub.f32 %v250, %v295
        %v381 = vsub.f32 %v251, %v295
        %v382 = vsub.f32 %v252, %v295
        %v383 = vsub.f32 %v253, %v295
        %v384 = vsub.f32 %v254, %v295
        %v385 = vsub.f32 %v255, %v295
        %v386 = vsub.f32 %v256, %v295
        %v387 = vsub.f32 %v257, %v295
        %v388 = vsub.f32 %v258, %v295
        %v389 = vsub.f32 %v259, %v295
        %v390 = vsub.f32 %v260, %v295
        %v391 = vsub.f32 %v261, %v295
        %v392 = vsub.f32 %v262, %v295
        %v393 = vsub.f32 %v263, %v295
        %v394 = vsub.f32 %v264, %v295
        %v395 = vsub.f32 %v265, %v295
        %v396 = vsub.f32 %v266, %v295
        %v397 = vsub.f32 %v267, %v295
        %v398 = vsub.f32 %v268, %v295
        %v399 = vsub.f32 %v269, %v295
        %v400 = vsub.f32 %v270, %v295
        %v401 = vsub.f32 %v271, %v295
        %v402 = vsub.f32 %v272, %v295
        %v403 = vsub.f32 %v273, %v295
        %v404 = vsub.f32 %v274, %v295
        %v405 = vsub.f32 %v275, %v295
        %v406 = vsub.f32 %v276, %v295
        %v407 = vsub.f32 %v277, %v295
        %v408 = vsub.f32 %v278, %v295
        %v409 = vsub.f32 %v279, %v295
        %v410 = vsub.f32 %v280, %v295
        %v411 = vsub.f32 %v281, %v295
        %v412 = vsub.f32 %v282, %v295
        %v413 = vsub.f32 %v283, %v295
        %v414 = vsub.f32 %v284, %v295
        %v415 = vsub.f32 %v285, %v295
        %v416 = vsub.f32 %v286, %v295
        %v417 = vsub.f32 %v287, %v295
        %v418 = vsub.f32 %v288, %v295
        %v419 = vsub.f32 %v289, %v295
        %v420 = vsub.f32 %v290, %v295
        %v421 = vsub.f32 %v291, %v295
        %v422 = vsub.f32 %v292, %v295
        %v423 = vsub.f32 %v293, %v295
        %vm424 = vcmp.gt.f32.partialorder %v296, 0.0
        %vm425 = vcmp.gt.f32.partialorder %v297, 0.0
        %vm426 = vcmp.gt.f32.partialorder %v298, 0.0
        %vm427 = vcmp.gt.f32.partialorder %v299, 0.0
        %vm428 = vcmp.gt.f32.partialorder %v300, 0.0
        %vm429 = vcmp.gt.f32.partialorder %v301, 0.0
        %vm430 = vcmp.gt.f32.partialorder %v302, 0.0
        %vm431 = vcmp.gt.f32.partialorder %v303, 0.0
        %vm432 = vcmp.gt.f32.partialorder %v304, 0.0
        %vm433 = vcmp.gt.f32.partialorder %v305, 0.0
        %vm434 = vcmp.gt.f32.partialorder %v306, 0.0
        %vm435 = vcmp.gt.f32.partialorder %v307, 0.0
        %vm436 = vcmp.gt.f32.partialorder %v308, 0.0
        %vm437 = vcmp.gt.f32.partialorder %v309, 0.0
        %vm438 = vcmp.gt.f32.partialorder %v310, 0.0
        %vm439 = vcmp.gt.f32.partialorder %v311, 0.0
        %vm440 = vcmp.gt.f32.partialorder %v312, 0.0
        %vm441 = vcmp.gt.f32.partialorder %v313, 0.0
        %vm442 = vcmp.gt.f32.partialorder %v314, 0.0
        %vm443 = vcmp.gt.f32.partialorder %v315, 0.0
        %vm444 = vcmp.gt.f32.partialorder %v316, 0.0
        %vm445 = vcmp.gt.f32.partialorder %v317, 0.0
        %vm446 = vcmp.gt.f32.partialorder %v318, 0.0
        %vm447 = vcmp.gt.f32.partialorder %v319, 0.0
        %vm448 = vcmp.gt.f32.partialorder %v320, 0.0
        %vm449 = vcmp.gt.f32.partialorder %v321, 0.0
        %vm450 = vcmp.gt.f32.partialorder %v322, 0.0
        %vm451 = vcmp.gt.f32.partialorder %v323, 0.0
        %vm452 = vcmp.gt.f32.partialorder %v324, 0.0
        %vm453 = vcmp.gt.f32.partialorder %v325, 0.0
        %vm454 = vcmp.gt.f32.partialorder %v326, 0.0
        %vm455 = vcmp.gt.f32.partialorder %v327, 0.0
        %vm456 = vcmp.gt.f32.partialorder %v328, 0.0
        %vm457 = vcmp.gt.f32.partialorder %v329, 0.0
        %vm458 = vcmp.gt.f32.partialorder %v330, 0.0
        %vm459 = vcmp.gt.f32.partialorder %v331, 0.0
        %vm460 = vcmp.gt.f32.partialorder %v332, 0.0
        %vm461 = vcmp.gt.f32.partialorder %v333, 0.0
        %vm462 = vcmp.gt.f32.partialorder %v334, 0.0
        %vm463 = vcmp.gt.f32.partialorder %v335, 0.0
        %vm464 = vcmp.gt.f32.partialorder %v336, 0.0
        %vm465 = vcmp.gt.f32.partialorder %v337, 0.0
        %vm466 = vcmp.gt.f32.partialorder %v338, 0.0
        %vm467 = vcmp.gt.f32.partialorder %v339, 0.0
        %vm468 = vcmp.gt.f32.partialorder %v340, 0.0
        %vm469 = vcmp.gt.f32.partialorder %v341, 0.0
        %vm470 = vcmp.gt.f32.partialorder %v342, 0.0
        %vm471 = vcmp.gt.f32.partialorder %v343, 0.0
        %vm472 = vcmp.gt.f32.partialorder %v344, 0.0
        %vm473 = vcmp.gt.f32.partialorder %v345, 0.0
        %vm474 = vcmp.gt.f32.partialorder %v346, 0.0
        %vm475 = vcmp.gt.f32.partialorder %v347, 0.0
        %vm476 = vcmp.gt.f32.partialorder %v348, 0.0
        %vm477 = vcmp.gt.f32.partialorder %v349, 0.0
        %vm478 = vcmp.gt.f32.partialorder %v350, 0.0
        %vm479 = vcmp.gt.f32.partialorder %v351, 0.0
        %vm480 = vcmp.gt.f32.partialorder %v352, 0.0
        %vm481 = vcmp.gt.f32.partialorder %v353, 0.0
        %vm482 = vcmp.gt.f32.partialorder %v354, 0.0
        %vm483 = vcmp.gt.f32.partialorder %v355, 0.0
        %vm484 = vcmp.gt.f32.partialorder %v356, 0.0
        %vm485 = vcmp.gt.f32.partialorder %v357, 0.0
        %vm486 = vcmp.gt.f32.partialorder %v358, 0.0
        %vm487 = vcmp.gt.f32.partialorder %v359, 0.0
        %vm488 = vcmp.gt.f32.partialorder %v360, 0.0
        %vm489 = vcmp.gt.f32.partialorder %v361, 0.0
        %vm490 = vcmp.gt.f32.partialorder %v362, 0.0
        %vm491 = vcmp.gt.f32.partialorder %v363, 0.0
        %vm492 = vcmp.gt.f32.partialorder %v364, 0.0
        %vm493 = vcmp.gt.f32.partialorder %v365, 0.0
        %vm494 = vcmp.gt.f32.partialorder %v366, 0.0
        %vm495 = vcmp.gt.f32.partialorder %v367, 0.0
        %vm496 = vcmp.gt.f32.partialorder %v368, 0.0
        %vm497 = vcmp.gt.f32.partialorder %v369, 0.0
        %vm498 = vcmp.gt.f32.partialorder %v370, 0.0
        %vm499 = vcmp.gt.f32.partialorder %v371, 0.0
        %vm500 = vcmp.gt.f32.partialorder %v372, 0.0
        %vm501 = vcmp.gt.f32.partialorder %v373, 0.0
        %vm502 = vcmp.gt.f32.partialorder %v374, 0.0
        %vm503 = vcmp.gt.f32.partialorder %v375, 0.0
        %vm504 = vcmp.gt.f32.partialorder %v376, 0.0
        %vm505 = vcmp.gt.f32.partialorder %v377, 0.0
        %vm506 = vcmp.gt.f32.partialorder %v378, 0.0
        %vm507 = vcmp.gt.f32.partialorder %v379, 0.0
        %vm508 = vcmp.gt.f32.partialorder %v380, 0.0
        %vm509 = vcmp.gt.f32.partialorder %v381, 0.0
        %vm510 = vcmp.gt.f32.partialorder %v382, 0.0
        %vm511 = vcmp.gt.f32.partialorder %v383, 0.0
        %vm512 = vcmp.gt.f32.partialorder %v384, 0.0
        %vm513 = vcmp.gt.f32.partialorder %v385, 0.0
        %vm514 = vcmp.gt.f32.partialorder %v386, 0.0
        %vm515 = vcmp.gt.f32.partialorder %v387, 0.0
        %vm516 = vcmp.gt.f32.partialorder %v388, 0.0
        %vm517 = vcmp.gt.f32.partialorder %v389, 0.0
        %vm518 = vcmp.gt.f32.partialorder %v390, 0.0
        %vm519 = vcmp.gt.f32.partialorder %v391, 0.0
        %vm520 = vcmp.gt.f32.partialorder %v392, 0.0
        %vm521 = vcmp.gt.f32.partialorder %v393, 0.0
        %vm522 = vcmp.gt.f32.partialorder %v394, 0.0
        %vm523 = vcmp.gt.f32.partialorder %v395, 0.0
        %vm524 = vcmp.gt.f32.partialorder %v396, 0.0
        %vm525 = vcmp.gt.f32.partialorder %v397, 0.0
        %vm526 = vcmp.gt.f32.partialorder %v398, 0.0
        %vm527 = vcmp.gt.f32.partialorder %v399, 0.0
        %vm528 = vcmp.gt.f32.partialorder %v400, 0.0
        %vm529 = vcmp.gt.f32.partialorder %v401, 0.0
        %vm530 = vcmp.gt.f32.partialorder %v402, 0.0
        %vm531 = vcmp.gt.f32.partialorder %v403, 0.0
        %vm532 = vcmp.gt.f32.partialorder %v404, 0.0
        %vm533 = vcmp.gt.f32.partialorder %v405, 0.0
        %vm534 = vcmp.gt.f32.partialorder %v406, 0.0
        %vm535 = vcmp.gt.f32.partialorder %v407, 0.0
        %vm536 = vcmp.gt.f32.partialorder %v408, 0.0
        %vm537 = vcmp.gt.f32.partialorder %v409, 0.0
        %vm538 = vcmp.gt.f32.partialorder %v410, 0.0
        %vm539 = vcmp.gt.f32.partialorder %v411, 0.0
        %vm540 = vcmp.gt.f32.partialorder %v412, 0.0
        %vm541 = vcmp.gt.f32.partialorder %v413, 0.0
        %vm542 = vcmp.gt.f32.partialorder %v414, 0.0
        %vm543 = vcmp.gt.f32.partialorder %v415, 0.0
        %vm544 = vcmp.gt.f32.partialorder %v416, 0.0
        %vm545 = vcmp.gt.f32.partialorder %v417, 0.0
        %vm546 = vcmp.gt.f32.partialorder %v418, 0.0
        %vm547 = vcmp.gt.f32.partialorder %v419, 0.0
        %vm548 = vcmp.gt.f32.partialorder %v420, 0.0
        %vm549 = vcmp.gt.f32.partialorder %v421, 0.0
        %vm550 = vcmp.gt.f32.partialorder %v422, 0.0
        %vm551 = vcmp.gt.f32.partialorder %v423, 0.0
        %v552 = vsel %vm424, 1, 0
        %v553 = vsel %vm425, 1, 0
        %v554 = vsel %vm426, 1, 0
        %v555 = vsel %vm427, 1, 0
        %v556 = vsel %vm428, 1, 0
        %v557 = vsel %vm429, 1, 0
        %v558 = vsel %vm430, 1, 0
        %v559 = vsel %vm431, 1, 0
        %v560 = vsel %vm432, 1, 0
        %v561 = vsel %vm433, 1, 0
        %v562 = vsel %vm434, 1, 0
        %v563 = vsel %vm435, 1, 0
        %v564 = vsel %vm436, 1, 0
        %v565 = vsel %vm437, 1, 0
        %v566 = vsel %vm438, 1, 0
        %v567 = vsel %vm439, 1, 0
        %v568 = vsel %vm440, 1, 0
        %v569 = vsel %vm441, 1, 0
        %v570 = vsel %vm442, 1, 0
        %v571 = vsel %vm443, 1, 0
        %v572 = vsel %vm444, 1, 0
        %v573 = vsel %vm445, 1, 0
        %v574 = vsel %vm446, 1, 0
        %v575 = vsel %vm447, 1, 0
        %v576 = vsel %vm448, 1, 0
        %v577 = vsel %vm449, 1, 0
        %v578 = vsel %vm450, 1, 0
        %v579 = vsel %vm451, 1, 0
        %v580 = vsel %vm452, 1, 0
        %v581 = vsel %vm453, 1, 0
        %v582 = vsel %vm454, 1, 0
        %v583 = vsel %vm455, 1, 0
        %v584 = vsel %vm456, 1, 0
        %v585 = vsel %vm457, 1, 0
        %v586 = vsel %vm458, 1, 0
        %v587 = vsel %vm459, 1, 0
        %v588 = vsel %vm460, 1, 0
        %v589 = vsel %vm461, 1, 0
        %v590 = vsel %vm462, 1, 0
        %v591 = vsel %vm463, 1, 0
        %v592 = vsel %vm464, 1, 0
        %v593 = vsel %vm465, 1, 0
        %v594 = vsel %vm466, 1, 0
        %v595 = vsel %vm467, 1, 0
        %v596 = vsel %vm468, 1, 0
        %v597 = vsel %vm469, 1, 0
        %v598 = vsel %vm470, 1, 0
        %v599 = vsel %vm471, 1, 0
        %v600 = vsel %vm472, 1, 0
        %v601 = vsel %vm473, 1, 0
        %v602 = vsel %vm474, 1, 0
        %v603 = vsel %vm475, 1, 0
        %v604 = vsel %vm476, 1, 0
        %v605 = vsel %vm477, 1, 0
        %v606 = vsel %vm478, 1, 0
        %v607 = vsel %vm479, 1, 0
        %v608 = vsel %vm480, 1, 0
        %v609 = vsel %vm481, 1, 0
        %v610 = vsel %vm482, 1, 0
        %v611 = vsel %vm483, 1, 0
        %v612 = vsel %vm484, 1, 0
        %v613 = vsel %vm485, 1, 0
        %v614 = vsel %vm486, 1, 0
        %v615 = vsel %vm487, 1, 0
        %v616 = vsel %vm488, 1, 0
        %v617 = vsel %vm489, 1, 0
        %v618 = vsel %vm490, 1, 0
        %v619 = vsel %vm491, 1, 0
        %v620 = vsel %vm492, 1, 0
        %v621 = vsel %vm493, 1, 0
        %v622 = vsel %vm494, 1, 0
        %v623 = vsel %vm495, 1, 0
        %v624 = vsel %vm496, 1, 0
        %v625 = vsel %vm497, 1, 0
        %v626 = vsel %vm498, 1, 0
        %v627 = vsel %vm499, 1, 0
        %v628 = vsel %vm500, 1, 0
        %v629 = vsel %vm501, 1, 0
        %v630 = vsel %vm502, 1, 0
        %v631 = vsel %vm503, 1, 0
        %v632 = vsel %vm504, 1, 0
        %v633 = vsel %vm505, 1, 0
        %v634 = vsel %vm506, 1, 0
        %v635 = vsel %vm507, 1, 0
        %v636 = vsel %vm508, 1, 0
        %v637 = vsel %vm509, 1, 0
        %v638 = vsel %vm510, 1, 0
        %v639 = vsel %vm511, 1, 0
        %v640 = vsel %vm512, 1, 0
        %v641 = vsel %vm513, 1, 0
        %v642 = vsel %vm514, 1, 0
        %v643 = vsel %vm515, 1, 0
        %v644 = vsel %vm516, 1, 0
        %v645 = vsel %vm517, 1, 0
        %v646 = vsel %vm518, 1, 0
        %v647 = vsel %vm519, 1, 0
        %v648 = vsel %vm520, 1, 0
        %v649 = vsel %vm521, 1, 0
        %v650 = vsel %vm522, 1, 0
        %v651 = vsel %vm523, 1, 0
        %v652 = vsel %vm524, 1, 0
        %v653 = vsel %vm525, 1, 0
        %v654 = vsel %vm526, 1, 0
        %v655 = vsel %vm527, 1, 0
        %v656 = vsel %vm528, 1, 0
        %v657 = vsel %vm529, 1, 0
        %v658 = vsel %vm530, 1, 0
        %v659 = vsel %vm531, 1, 0
        %v660 = vsel %vm532, 1, 0
        %v661 = vsel %vm533, 1, 0
        %v662 = vsel %vm534, 1, 0
        %v663 = vsel %vm535, 1, 0
        %v664 = vsel %vm536, 1, 0
        %v665 = vsel %vm537, 1, 0
        %v666 = vsel %vm538, 1, 0
        %v667 = vsel %vm539, 1, 0
        %v668 = vsel %vm540, 1, 0
        %v669 = vsel %vm541, 1, 0
        %v670 = vsel %vm542, 1, 0
        %v671 = vsel %vm543, 1, 0
        %v672 = vsel %vm544, 1, 0
        %v673 = vsel %vm545, 1, 0
        %v674 = vsel %vm546, 1, 0
        %v675 = vsel %vm547, 1, 0
        %v676 = vsel %vm548, 1, 0
        %v677 = vsel %vm549, 1, 0
        %v678 = vsel %vm550, 1, 0
        %v679 = vsel %vm551, 1, 0
        %v680 = vcvt.s32.f32 %v552
        %v681 = vcvt.s32.f32 %v553
        %v682 = vcvt.s32.f32 %v554
        %v683 = vcvt.s32.f32 %v555
        %v684 = vcvt.s32.f32 %v556
        %v685 = vcvt.s32.f32 %v557
        %v686 = vcvt.s32.f32 %v558
        %v687 = vcvt.s32.f32 %v559
        %v688 = vcvt.s32.f32 %v560
        %v689 = vcvt.s32.f32 %v561
        %v690 = vcvt.s32.f32 %v562
        %v691 = vcvt.s32.f32 %v563
        %v692 = vcvt.s32.f32 %v564
        %v693 = vcvt.s32.f32 %v565
        %v694 = vcvt.s32.f32 %v566
        %v695 = vcvt.s32.f32 %v567
        %v696 = vcvt.s32.f32 %v568
        %v697 = vcvt.s32.f32 %v569
        %v698 = vcvt.s32.f32 %v570
        %v699 = vcvt.s32.f32 %v571
        %v700 = vcvt.s32.f32 %v572
        %v701 = vcvt.s32.f32 %v573
        %v702 = vcvt.s32.f32 %v574
        %v703 = vcvt.s32.f32 %v575
        %v704 = vcvt.s32.f32 %v576
        %v705 = vcvt.s32.f32 %v577
        %v706 = vcvt.s32.f32 %v578
        %v707 = vcvt.s32.f32 %v579
        %v708 = vcvt.s32.f32 %v580
        %v709 = vcvt.s32.f32 %v581
        %v710 = vcvt.s32.f32 %v582
        %v711 = vcvt.s32.f32 %v583
        %v712 = vcvt.s32.f32 %v584
        %v713 = vcvt.s32.f32 %v585
        %v714 = vcvt.s32.f32 %v586
        %v715 = vcvt.s32.f32 %v587
        %v716 = vcvt.s32.f32 %v588
        %v717 = vcvt.s32.f32 %v589
        %v718 = vcvt.s32.f32 %v590
        %v719 = vcvt.s32.f32 %v591
        %v720 = vcvt.s32.f32 %v592
        %v721 = vcvt.s32.f32 %v593
        %v722 = vcvt.s32.f32 %v594
        %v723 = vcvt.s32.f32 %v595
        %v724 = vcvt.s32.f32 %v596
        %v725 = vcvt.s32.f32 %v597
        %v726 = vcvt.s32.f32 %v598
        %v727 = vcvt.s32.f32 %v599
        %v728 = vcvt.s32.f32 %v600
        %v729 = vcvt.s32.f32 %v601
        %v730 = vcvt.s32.f32 %v602
        %v731 = vcvt.s32.f32 %v603
        %v732 = vcvt.s32.f32 %v604
        %v733 = vcvt.s32.f32 %v605
        %v734 = vcvt.s32.f32 %v606
        %v735 = vcvt.s32.f32 %v607
        %v736 = vcvt.s32.f32 %v608
        %v737 = vcvt.s32.f32 %v609
        %v738 = vcvt.s32.f32 %v610
        %v739 = vcvt.s32.f32 %v611
        %v740 = vcvt.s32.f32 %v612
        %v741 = vcvt.s32.f32 %v613
        %v742 = vcvt.s32.f32 %v614
        %v743 = vcvt.s32.f32 %v615
        %v744 = vcvt.s32.f32 %v616
        %v745 = vcvt.s32.f32 %v617
        %v746 = vcvt.s32.f32 %v618
        %v747 = vcvt.s32.f32 %v619
        %v748 = vcvt.s32.f32 %v620
        %v749 = vcvt.s32.f32 %v621
        %v750 = vcvt.s32.f32 %v622
        %v751 = vcvt.s32.f32 %v623
        %v752 = vcvt.s32.f32 %v624
        %v753 = vcvt.s32.f32 %v625
        %v754 = vcvt.s32.f32 %v626
        %v755 = vcvt.s32.f32 %v627
        %v756 = vcvt.s32.f32 %v628
        %v757 = vcvt.s32.f32 %v629
        %v758 = vcvt.s32.f32 %v630
        %v759 = vcvt.s32.f32 %v631
        %v760 = vcvt.s32.f32 %v632
        %v761 = vcvt.s32.f32 %v633
        %v762 = vcvt.s32.f32 %v634
        %v763 = vcvt.s32.f32 %v635
        %v764 = vcvt.s32.f32 %v636
        %v765 = vcvt.s32.f32 %v637
        %v766 = vcvt.s32.f32 %v638
        %v767 = vcvt.s32.f32 %v639
        %v768 = vcvt.s32.f32 %v640
        %v769 = vcvt.s32.f32 %v641
        %v770 = vcvt.s32.f32 %v642
        %v771 = vcvt.s32.f32 %v643
        %v772 = vcvt.s32.f32 %v644
        %v773 = vcvt.s32.f32 %v645
        %v774 = vcvt.s32.f32 %v646
        %v775 = vcvt.s32.f32 %v647
        %v776 = vcvt.s32.f32 %v648
        %v777 = vcvt.s32.f32 %v649
        %v778 = vcvt.s32.f32 %v650
        %v779 = vcvt.s32.f32 %v651
        %v780 = vcvt.s32.f32 %v652
        %v781 = vcvt.s32.f32 %v653
        %v782 = vcvt.s32.f32 %v654
        %v783 = vcvt.s32.f32 %v655
        %v784 = vcvt.s32.f32 %v656
        %v785 = vcvt.s32.f32 %v657
        %v786 = vcvt.s32.f32 %v658
        %v787 = vcvt.s32.f32 %v659
        %v788 = vcvt.s32.f32 %v660
        %v789 = vcvt.s32.f32 %v661
        %v790 = vcvt.s32.f32 %v662
        %v791 = vcvt.s32.f32 %v663
        %v792 = vcvt.s32.f32 %v664
        %v793 = vcvt.s32.f32 %v665
        %v794 = vcvt.s32.f32 %v666
        %v795 = vcvt.s32.f32 %v667
        %v796 = vcvt.s32.f32 %v668
        %v797 = vcvt.s32.f32 %v669
        %v798 = vcvt.s32.f32 %v670
        %v799 = vcvt.s32.f32 %v671
        %v800 = vcvt.s32.f32 %v672
        %v801 = vcvt.s32.f32 %v673
        %v802 = vcvt.s32.f32 %v674
        %v803 = vcvt.s32.f32 %v675
        %v804 = vcvt.s32.f32 %v676
        %v805 = vcvt.s32.f32 %v677
        %v806 = vcvt.s32.f32 %v678
        %v807 = vcvt.s32.f32 %v679
        %808 = vst [vmem:[%s163] sm:$0xff] %v680
        %809 = vst [vmem:[%s163 + $0x8] sm:$0xff] %v681
        %810 = vst [vmem:[%s163 + $0x10] sm:$0xff] %v682
        %811 = vst [vmem:[%s163 + $0x18] sm:$0xff] %v683
        %812 = vst [vmem:[%s163 + $0x20] sm:$0xff] %v684
        %813 = vst [vmem:[%s163 + $0x28] sm:$0xff] %v685
        %814 = vst [vmem:[%s163 + $0x30] sm:$0xff] %v686
        %815 = vst [vmem:[%s163 + $0x38] sm:$0xff] %v687
        %816 = vst [vmem:[%s163 + $0x40] sm:$0xff] %v688
        %817 = vst [vmem:[%s163 + $0x48] sm:$0xff] %v689
        %818 = vst [vmem:[%s163 + $0x50] sm:$0xff] %v690
        %819 = vst [vmem:[%s163 + $0x58] sm:$0xff] %v691
        %820 = vst [vmem:[%s163 + $0x60] sm:$0xff] %v692
        %821 = vst [vmem:[%s163 + $0x68] sm:$0xff] %v693
        %822 = vst [vmem:[%s163 + $0x70] sm:$0xff] %v694
        %823 = vst [vmem:[%s163 + $0x78] sm:$0xff] %v695
        %824 = vst [vmem:[%s163 + $0x80] sm:$0xff] %v696
        %825 = vst [vmem:[%s163 + $0x88] sm:$0xff] %v697
        %826 = vst [vmem:[%s163 + $0x90] sm:$0xff] %v698
        %827 = vst [vmem:[%s163 + $0x98] sm:$0xff] %v699
        %828 = vst [vmem:[%s163 + $0xa0] sm:$0xff] %v700
        %829 = vst [vmem:[%s163 + $0xa8] sm:$0xff] %v701
        %830 = vst [vmem:[%s163 + $0xb0] sm:$0xff] %v702
        %831 = vst [vmem:[%s163 + $0xb8] sm:$0xff] %v703
        %832 = vst [vmem:[%s163 + $0xc0] sm:$0xff] %v704
        %833 = vst [vmem:[%s163 + $0xc8] sm:$0xff] %v705
        %834 = vst [vmem:[%s163 + $0xd0] sm:$0xff] %v706
        %835 = vst [vmem:[%s163 + $0xd8] sm:$0xff] %v707
        %836 = vst [vmem:[%s163 + $0xe0] sm:$0xff] %v708
        %837 = vst [vmem:[%s163 + $0xe8] sm:$0xff] %v709
        %838 = vst [vmem:[%s163 + $0xf0] sm:$0xff] %v710
        %839 = vst [vmem:[%s163 + $0xf8] sm:$0xff] %v711
        %840 = vst [vmem:[%s163 + $0x100] sm:$0xff] %v712
        %841 = vst [vmem:[%s163 + $0x108] sm:$0xff] %v713
        %842 = vst [vmem:[%s163 + $0x110] sm:$0xff] %v714
        %843 = vst [vmem:[%s163 + $0x118] sm:$0xff] %v715
        %844 = vst [vmem:[%s163 + $0x120] sm:$0xff] %v716
        %845 = vst [vmem:[%s163 + $0x128] sm:$0xff] %v717
        %846 = vst [vmem:[%s163 + $0x130] sm:$0xff] %v718
        %847 = vst [vmem:[%s163 + $0x138] sm:$0xff] %v719
        %848 = vst [vmem:[%s163 + $0x140] sm:$0xff] %v720
        %849 = vst [vmem:[%s163 + $0x148] sm:$0xff] %v721
        %850 = vst [vmem:[%s163 + $0x150] sm:$0xff] %v722
        %851 = vst [vmem:[%s163 + $0x158] sm:$0xff] %v723
        %852 = vst [vmem:[%s163 + $0x160] sm:$0xff] %v724
        %853 = vst [vmem:[%s163 + $0x168] sm:$0xff] %v725
        %854 = vst [vmem:[%s163 + $0x170] sm:$0xff] %v726
        %855 = vst [vmem:[%s163 + $0x178] sm:$0xff] %v727
        %856 = vst [vmem:[%s163 + $0x180] sm:$0xff] %v728
        %857 = vst [vmem:[%s163 + $0x188] sm:$0xff] %v729
        %858 = vst [vmem:[%s163 + $0x190] sm:$0xff] %v730
        %859 = vst [vmem:[%s163 + $0x198] sm:$0xff] %v731
        %860 = vst [vmem:[%s163 + $0x1a0] sm:$0xff] %v732
        %861 = vst [vmem:[%s163 + $0x1a8] sm:$0xff] %v733
        %862 = vst [vmem:[%s163 + $0x1b0] sm:$0xff] %v734
        %863 = vst [vmem:[%s163 + $0x1b8] sm:$0xff] %v735
        %864 = vst [vmem:[%s163 + $0x1c0] sm:$0xff] %v736
        %865 = vst [vmem:[%s163 + $0x1c8] sm:$0xff] %v737
        %866 = vst [vmem:[%s163 + $0x1d0] sm:$0xff] %v738
        %867 = vst [vmem:[%s163 + $0x1d8] sm:$0xff] %v739
        %868 = vst [vmem:[%s163 + $0x1e0] sm:$0xff] %v740
        %869 = vst [vmem:[%s163 + $0x1e8] sm:$0xff] %v741
        %870 = vst [vmem:[%s163 + $0x1f0] sm:$0xff] %v742
        %871 = vst [vmem:[%s163 + $0x1f8] sm:$0xff] %v743
        %872 = vst [vmem:[%s163 + $0x200] sm:$0xff] %v744
        %873 = vst [vmem:[%s163 + $0x208] sm:$0xff] %v745
        %874 = vst [vmem:[%s163 + $0x210] sm:$0xff] %v746
        %875 = vst [vmem:[%s163 + $0x218] sm:$0xff] %v747
        %876 = vst [vmem:[%s163 + $0x220] sm:$0xff] %v748
        %877 = vst [vmem:[%s163 + $0x228] sm:$0xff] %v749
        %878 = vst [vmem:[%s163 + $0x230] sm:$0xff] %v750
        %879 = vst [vmem:[%s163 + $0x238] sm:$0xff] %v751
        %880 = vst [vmem:[%s163 + $0x240] sm:$0xff] %v752
        %881 = vst [vmem:[%s163 + $0x248] sm:$0xff] %v753
        %882 = vst [vmem:[%s163 + $0x250] sm:$0xff] %v754
        %883 = vst [vmem:[%s163 + $0x258] sm:$0xff] %v755
        %884 = vst [vmem:[%s163 + $0x260] sm:$0xff] %v756
        %885 = vst [vmem:[%s163 + $0x268] sm:$0xff] %v757
        %886 = vst [vmem:[%s163 + $0x270] sm:$0xff] %v758
        %887 = vst [vmem:[%s163 + $0x278] sm:$0xff] %v759
        %888 = vst [vmem:[%s163 + $0x280] sm:$0xff] %v760
        %889 = vst [vmem:[%s163 + $0x288] sm:$0xff] %v761
        %890 = vst [vmem:[%s163 + $0x290] sm:$0xff] %v762
        %891 = vst [vmem:[%s163 + $0x298] sm:$0xff] %v763
        %892 = vst [vmem:[%s163 + $0x2a0] sm:$0xff] %v764
        %893 = vst [vmem:[%s163 + $0x2a8] sm:$0xff] %v765
        %894 = vst [vmem:[%s163 + $0x2b0] sm:$0xff] %v766
        %895 = vst [vmem:[%s163 + $0x2b8] sm:$0xff] %v767
        %896 = vst [vmem:[%s163 + $0x2c0] sm:$0xff] %v768
        %897 = vst [vmem:[%s163 + $0x2c8] sm:$0xff] %v769
        %898 = vst [vmem:[%s163 + $0x2d0] sm:$0xff] %v770
        %899 = vst [vmem:[%s163 + $0x2d8] sm:$0xff] %v771
        %900 = vst [vmem:[%s163 + $0x2e0] sm:$0xff] %v772
        %901 = vst [vmem:[%s163 + $0x2e8] sm:$0xff] %v773
        %902 = vst [vmem:[%s163 + $0x2f0] sm:$0xff] %v774
        %903 = vst [vmem:[%s163 + $0x2f8] sm:$0xff] %v775
        %904 = vst [vmem:[%s163 + $0x300] sm:$0xff] %v776
        %905 = vst [vmem:[%s163 + $0x308] sm:$0xff] %v777
        %906 = vst [vmem:[%s163 + $0x310] sm:$0xff] %v778
        %907 = vst [vmem:[%s163 + $0x318] sm:$0xff] %v779
        %908 = vst [vmem:[%s163 + $0x320] sm:$0xff] %v780
        %909 = vst [vmem:[%s163 + $0x328] sm:$0xff] %v781
        %910 = vst [vmem:[%s163 + $0x330] sm:$0xff] %v782
        %911 = vst [vmem:[%s163 + $0x338] sm:$0xff] %v783
        %912 = vst [vmem:[%s163 + $0x340] sm:$0xff] %v784
        %913 = vst [vmem:[%s163 + $0x348] sm:$0xff] %v785
        %914 = vst [vmem:[%s163 + $0x350] sm:$0xff] %v786
        %915 = vst [vmem:[%s163 + $0x358] sm:$0xff] %v787
        %916 = vst [vmem:[%s163 + $0x360] sm:$0xff] %v788
        %917 = vst [vmem:[%s163 + $0x368] sm:$0xff] %v789
        %918 = vst [vmem:[%s163 + $0x370] sm:$0xff] %v790
        %919 = vst [vmem:[%s163 + $0x378] sm:$0xff] %v791
        %920 = vst [vmem:[%s163 + $0x380] sm:$0xff] %v792
        %921 = vst [vmem:[%s163 + $0x388] sm:$0xff] %v793
        %922 = vst [vmem:[%s163 + $0x390] sm:$0xff] %v794
        %923 = vst [vmem:[%s163 + $0x398] sm:$0xff] %v795
        %924 = vst [vmem:[%s163 + $0x3a0] sm:$0xff] %v796
        %925 = vst [vmem:[%s163 + $0x3a8] sm:$0xff] %v797
        %926 = vst [vmem:[%s163 + $0x3b0] sm:$0xff] %v798
        %927 = vst [vmem:[%s163 + $0x3b8] sm:$0xff] %v799
        %928 = vst [vmem:[%s163 + $0x3c0] sm:$0xff] %v800
        %929 = vst [vmem:[%s163 + $0x3c8] sm:$0xff] %v801
        %930 = vst [vmem:[%s163 + $0x3d0] sm:$0xff] %v802
        %931 = vst [vmem:[%s163 + $0x3d8] sm:$0xff] %v803
        %932 = vst [vmem:[%s163 + $0x3e0] sm:$0xff] %v804
        %933 = vst [vmem:[%s163 + $0x3e8] sm:$0xff] %v805
        %934 = vst [vmem:[%s163 + $0x3f0] sm:$0xff] %v806
        %935 = vst [vmem:[%s163 + $0x3f8] sm:$0xff] %v807
        %s936 = sand.u32 %s75, 1
        %s937 = scalar_lea.sflag [#allocation5], %s936
        %s938 = sand.u32 %s75, 1
        %s939 = smul.addr %s938, 1024
        %s940 = scalar_lea.vmem [#allocation6], %s939
        // Predicated region
        $region33: #{tpu_custom_call.1} parent=27 // pred_check
          %p941 = pneg %p85
        $region34: #{tpu_custom_call.1} parent=27 // pred_check_branch
          %943 = sbr.rel (%p941) target = $region36
        $region35: #{tpu_custom_call.1} parent=27 // pred_region
          %s944 = smul.u32 16, %s20
          %s946 = ssub.s32 16384, 16384
          %947 = vsyncadd %s937, %s946
          %s948 = smul.addr %s944, 8
          %s949 = smul.addr %s948, 128
          %s950 = scalar_lea.hbm %s2, %s949
          %s951 = sshll.u32 %s940, 4
          %s952 = int_to_ptr.vmem [resolvable:$true] %s951
          %957 = dma.vmem_to_hbm [thread:$0]  %s952, 16384, %s950, %s937, 1024, 1024, 64
        $region36: #{tpu_custom_call.1} parent=27 // pred_fallthru
          _
      $region28: #{tpu_custom_call.1} parent=5 // pred_fallthru
        _
      %p958 = scmp.le.s32.totalorder 2, %s15
      // Predicated region
      $region37: #{tpu_custom_call.1} parent=5 // pred_check
        %p959 = pneg %p958
      $region38: #{tpu_custom_call.1} parent=5 // pred_check_branch
        %961 = sbr.rel (%p959) target = $region40
      $region39: #{tpu_custom_call.1} parent=5 // pred_region
        %s962 = ssub.s32 %s15, 2
        // Predicated region
        $region41: #{tpu_custom_call.1} parent=39 // pred_check
          %p963 = pneg %p91
        $region42: #{tpu_custom_call.1} parent=39 // pred_check_branch
          %965 = sbr.rel (%p963) target = $region44
        $region43: #{tpu_custom_call.1} parent=39 // pred_region
          %s966 = sand.u32 %s76, 1
          %s967 = scalar_lea.sflag [#allocation5], %s966
          %s968 = sand.u32 %s76, 1
          %s969 = smul.addr %s968, 1024
          %s970 = scalar_lea.vmem [#allocation6], %s969
          %971 = dma.done %s967, 16384
        $region44: #{tpu_custom_call.1} parent=39 // pred_fallthru
          _
      $region40: #{tpu_custom_call.1} parent=5 // pred_fallthru
        _
    $region6: #{tpu_custom_call.1} parent=1 // loop_footer
      %s19 = sadd.s32 1, %s15
    $region7: #{tpu_custom_call.1} parent=1 // loop_footer_branch
      %14 = sbr.rel target = $region3
    $region8: #{tpu_custom_call.1} parent=1 // loop_exit
      _
    %972 = vsyncpa [#allocation4], 1
    %s973 = scalar_lea.sflag [#allocation4], 1
    %974 = vsyncpa %s973, 1
    %975 = vsyncpa [#allocation5], 1
    %s976 = scalar_lea.sflag [#allocation5], 1
    %977 = vsyncpa %s976, 1

</llo_original>
